<compile_context>
chip_gen: v6e
topology: v6e:2x2x1
jax: 0.10.0
libtpu: 0.0.40
codegen_flags: <defaults>
</compile_context>

<pallas_src>
import jax
import jax.numpy as jnp
from jax.experimental import pallas as pl
from jax.experimental.pallas import tpu as pltpu


# ---------------------------------------------------------------------------
# Median over the adjacency axis (axis=1) of a dense (BB, A, S) tile.
# Matches torch.quantile(x, 0.5, dim=1) (linear interpolation).
# Returns (BB, 1, S) float32.
# ---------------------------------------------------------------------------
def _median_over_adjacency(yp_native, sum_f32):
    A = yp_native.shape[1]
    if A == 1:
        return yp_native.astype(jnp.float32)
    if A == 2:
        return 0.5 * sum_f32
    if A in (3, 4):
        # Dense sublane reductions; min/max are exact in the native dtype.
        mn = jnp.min(yp_native, axis=1, keepdims=True).astype(jnp.float32)
        mx = jnp.max(yp_native, axis=1, keepdims=True).astype(jnp.float32)
        mid_sum = sum_f32 - mn - mx          # sum of the A-2 middle value(s)
        return mid_sum if A == 3 else 0.5 * mid_sum
    # A >= 5: exact rank-based selection.  Ties are broken by adjacency index
    # so ranks form a permutation of 0..A-1.  Only O(1) (BB, A, S) tensors are
    # live at any time (rank accumulator + comparisons), so no vreg spills.
    idx = jax.lax.broadcasted_iota(jnp.int32, yp_native.shape, 1)
    rank = jnp.zeros(yp_native.shape, jnp.int32)
    for a in range(A):                        # A is small; unrolled at trace time
        plane = yp_native[:, a:a + 1, :]      # (BB, 1, S), broadcasts on sublanes
        less = (plane < yp_native) | ((plane == yp_native) & (a < idx))
        rank = rank + less.astype(jnp.int32)
    yp32 = yp_native.astype(jnp.float32)
    k_hi = A // 2
    sel_hi = jnp.sum(jnp.where(rank == k_hi, yp32, 0.0), axis=1, keepdims=True)
    if A % 2 == 1:
        return sel_hi
    sel_lo = jnp.sum(jnp.where(rank == k_hi - 1, yp32, 0.0), axis=1, keepdims=True)
    return 0.5 * (sel_lo + sel_hi)


# ---------------------------------------------------------------------------
# Pallas kernel: one grid step processes BB batch elements.
# ---------------------------------------------------------------------------
def _loss_kernel(yp_ref, yt_ref, ae_ref, se_ref, ploss_ref):
    """
    yp_ref:    (BB, A, S) native dtype  predictions (spatial flattened on lanes)
    yt_ref:    (BB, 1, S) native dtype  targets
    ae_ref:    (BB, 1, S) f32           |median_A(y_pred) - y_true|
    se_ref:    (BB, 1, 1) f32           mean_S((mean_A(y_pred) - y_true)^2)
    ploss_ref: (BB, A, 1) f32           per-adjacency spatial MSE
    """
    yp_native = yp_ref[...]                        # native dtype
    yp = yp_native.astype(jnp.float32)             # in-kernel upcast
    yt = yt_ref[...].astype(jnp.float32)           # (BB, 1, S)
    A = yp.shape[1]
    S = yp.shape[2]
    inv_s = 1.0 / S
    inv_a = 1.0 / A

    # Residuals reused by both squared-error paths (dense (BB, A, S)).
    diff = yp - yt
    sq = diff * diff

    # Per-adjacency prediction loss: spatial MSE.
    ploss_ref[...] = jnp.sum(sq, axis=-1, keepdims=True) * inv_s     # (BB, A, 1)

    # point_prediction_se: mean_S((mean_A(y_pred) - y_true)^2).
    sum_yp = jnp.sum(yp, axis=1, keepdims=True)                      # (BB, 1, S)
    mean_diff = sum_yp * inv_a - yt
    se_ref[...] = jnp.sum(mean_diff * mean_diff, axis=-1,
                          keepdims=True) * inv_s                     # (BB, 1, 1)

    # point_prediction_ae: |median over adjacency - target| (dense median).
    med = _median_over_adjacency(yp_native, sum_yp)
    ae_ref[...] = jnp.abs(med - yt)


# ---------------------------------------------------------------------------
# VMEM accounting & batch-block sizing (tile-padding and generation aware).
# ---------------------------------------------------------------------------
def _ceil_to(x, m):
    return ((x + m - 1) // m) * m


def _tpu_vmem_capacity_bytes():
    try:
        cap = getattr(pltpu.get_tpu_info(), "vmem_capacity_bytes", None)
        if cap:
            return int(cap)
    except Exception:
        pass
    return 64 * 1024 * 1024        # conservative fallback (v7x-sized per-TC VMEM)


def _per_batch_vmem_bytes(A, S, in_itemsize):
    """Padded VMEM bytes per batch element of one grid step (BB = 1)."""
    sub_in = max(8, 32 // in_itemsize)          # sublane multiple of input dtype
    s_pad = _ceil_to(S, 128)
    a_in = _ceil_to(A, sub_in)
    a_32 = _ceil_to(A, 8)
    # Double-buffered native-dtype input blocks (y_pred + y_true).
    in_bytes = 2 * (a_in + sub_in) * s_pad * in_itemsize
    # Live f32 (A, S) intermediates (upcast / diff / sq; rank path adds ~2 more).
    n_big = 3 + (2 if A >= 5 else 0)
    big_bytes = n_big * a_32 * s_pad * 4
    # f32 (1, S) planes (yt, sum, mean_diff, median, ae value), padded to 8 sublanes.
    plane_bytes = 5 * 8 * s_pad * 4
    # Double-buffered output blocks (ae dominates; se / ploss tiny).
    out_bytes = 2 * (8 * s_pad * 4 + 8 * 128 * 4 + a_32 * 128 * 4)
    return in_bytes + big_bytes + plane_bytes + out_bytes


def _pick_batch_block(B, per_batch_bytes, budget_bytes, prefer_split):
    divisors = [d for d in range(1, B + 1) if B % d == 0]
    fitting = [d for d in divisors if d * per_batch_bytes <= budget_bytes] or [1]
    bb = max(fitting)
    # Only force a split (>= 2 grid steps) on multi-TensorCore chips.
    if prefer_split and bb == B and B > 1:
        smaller = [d for d in fitting if d < B]
        if smaller:
            bb = max(smaller)
    return bb


def expected_values_reductions(y_pred, y_true):
    """Returns (pp_ae (B,H,W) f32, pp_se (B,) f32, prediction_loss (B,A) f32)."""
    B, A, H, W = y_pred.shape
    S = H * W
    yp = y_pred.reshape(B, A, S)      # contiguous reshape -> free layout change
    yt = y_true.reshape(B, 1, S)

    in_itemsize = jnp.dtype(y_pred.dtype).itemsize
    per_batch = _per_batch_vmem_bytes(A, S, in_itemsize)

    vmem_cap = _tpu_vmem_capacity_bytes()
    vmem_cap = max(32 * 1024 * 1024, min(vmem_cap, 128 * 1024 * 1024))
    # Generation-aware sizing: ~3/8 of VMEM as block-sizing budget, ~3/4 as the
    # scoped limit => 24/48 MiB on v7x (64 MiB/TC), 48/96 MiB on v5e/v6e.
    budget = max(8 * 1024 * 1024, (vmem_cap * 3) // 8)
    vmem_limit = max(32 * 1024 * 1024, (vmem_cap * 3) // 4)
    # Heuristic: <= 96 MiB VMEM per core => v7x-class (2 TCs/chip), prefer
    # >= 2 grid steps so both cores get work; single-TC chips never split.
    prefer_split = vmem_cap <= 96 * 1024 * 1024

    BB = _pick_batch_block(B, per_batch, budget, prefer_split)
    grid = (B // BB,)

    out_shapes = (
        jax.ShapeDtypeStruct((B, 1, S), jnp.float32),   # pp_ae (spatial on lanes)
        jax.ShapeDtypeStruct((B, 1, 1), jnp.float32),   # pp_se
        jax.ShapeDtypeStruct((B, A, 1), jnp.float32),   # per-adjacency loss
    )
    grid_spec = pltpu.PrefetchScalarGridSpec(
        num_scalar_prefetch=0,
        grid=grid,
        in_specs=[
            pl.BlockSpec((BB, A, S), lambda b: (b, 0, 0)),
            pl.BlockSpec((BB, 1, S), lambda b: (b, 0, 0)),
        ],
        out_specs=[
            pl.BlockSpec((BB, 1, S), lambda b: (b, 0, 0)),
            pl.BlockSpec((BB, 1, 1), lambda b: (b, 0, 0)),
            pl.BlockSpec((BB, A, 1), lambda b: (b, 0, 0)),
        ],
    )
    ae, se, pls = pl.pallas_call(
        _loss_kernel,
        out_shape=out_shapes,
        grid_spec=grid_spec,
        compiler_params=pltpu.CompilerParams(
            dimension_semantics=("parallel",),
            vmem_limit_bytes=int(vmem_limit),
        ),
    )(yp, yt)

    return ae.reshape(B, H, W), se.reshape(B), pls.reshape(B, A)


# ---------------------------------------------------------------------------
# JAX/Pallas port of the PyTorch ExpectedValuesLoss forward pass.
# ---------------------------------------------------------------------------
class ExpectedValuesLoss:
    # TODO(synk): prediction_loss_fn is abstract (NotImplementedError) in the
    # PyTorch base class; per-(batch, adjacency) spatial MSE is used as the
    # concrete subclass behavior, computed inside the Pallas kernel.

    def __init__(self, gradient_estimator="sf", variance_reduction=True):
        self.gradient_estimator = gradient_estimator
        self.variance_reduction = variance_reduction

    def __call__(self, y_pred, y_true, log_likelihoods):
        B, n_adjs, H, W = y_pred.shape
        pp_ae, pp_se, prediction_loss = expected_values_reductions(y_pred, y_true)

        metrics = {"point_prediction_ae": pp_ae, "point_prediction_se": pp_se}

        if self.gradient_estimator == "sf":
            ll = jnp.sum(log_likelihoods, axis=-1)                 # (A,)
            pl_det = jax.lax.stop_gradient(prediction_loss)        # .detach()
            if self.variance_reduction:
                biased_sum = jnp.sum(pl_det, axis=-1, keepdims=True)
                unbiased_beta = (biased_sum - pl_det) / (n_adjs - 1)
            else:
                unbiased_beta = 0.0
            graph_loss = jnp.mean(ll[None, :] * (pl_det - unbiased_beta))
            total_loss = graph_loss + jnp.mean(prediction_loss)
            # Traced scalars (jit/grad safe) instead of .item()/float().
            metrics["graph_loss"] = graph_loss
            metrics["prediction_loss"] = jnp.mean(prediction_loss)
            return total_loss, metrics
        elif self.gradient_estimator == "st":
            return jnp.mean(prediction_loss), metrics
        else:
            raise ValueError(self.gradient_estimator)


if __name__ == "__main__":
    root = jax.random.PRNGKey(0)

    def check_case(case_key, B, A, H, W, dtype=jnp.float32, tol=1e-4):
        k1, k2 = jax.random.split(case_key)
        yp = jax.random.normal(k1, (B, A, H, W), dtype=jnp.float32).astype(dtype)
        yt = jax.random.normal(k2, (B, H, W), dtype=jnp.float32).astype(dtype)
        ae, se, pls = expected_values_reductions(yp, yt)
        jax.block_until_ready(ae)
        yp32 = yp.astype(jnp.float32)
        yt32 = yt.astype(jnp.float32)
        ref_ae = jnp.abs(jnp.quantile(yp32, 0.5, axis=1) - yt32)
        ref_se = jnp.mean((jnp.mean(yp32, axis=1) - yt32) ** 2, axis=(-1, -2))
        ref_pl = jnp.mean((yp32 - yt32[:, None]) ** 2, axis=(-1, -2))
        assert jnp.allclose(ae, ref_ae, atol=tol, rtol=tol), ("ae", B, A, dtype)
        assert jnp.allclose(se, ref_se, atol=tol, rtol=tol), ("se", B, A, dtype)
        assert jnp.allclose(pls, ref_pl, atol=tol, rtol=tol), ("pl", B, A, dtype)

    # Exercise every median path (A=1,2 trivial; 3,4 reduction formula; 5,6
    # rank selection) plus a bf16 case for the native-dtype comparator path.
    keys = jax.random.split(root, 8)
    for i, A in enumerate((1, 2, 3, 4, 5, 6)):
        check_case(keys[i], 2, A, 8, 16)
    check_case(keys[6], 2, 5, 8, 16, dtype=jnp.bfloat16, tol=2e-3)

    # Full forward pass at the reference shapes.
    k1, k2, k3 = jax.random.split(keys[7], 3)
    B, A, H, W = 2, 4, 16, 16
    y_pred = jax.random.normal(k1, (B, A, H, W), dtype=jnp.float32)
    y_true = jax.random.normal(k2, (B, H, W), dtype=jnp.float32)
    log_likelihoods = jax.random.normal(k3, (A, 8), dtype=jnp.float32)

    loss_mod = ExpectedValuesLoss(gradient_estimator="sf", variance_reduction=True)
    total_loss, metrics = loss_mod(y_pred, y_true, log_likelihoods)
    jax.block_until_ready(total_loss)
    jax.block_until_ready(metrics["point_prediction_ae"])
    jax.block_until_ready(metrics["point_prediction_se"])

    ref_ae = jnp.abs(jnp.quantile(y_pred, 0.5, axis=1) - y_true)
    ref_se = jnp.mean((jnp.mean(y_pred, axis=1) - y_true) ** 2, axis=(-1, -2))
    ref_pl = jnp.mean((y_pred - y_true[:, None]) ** 2, axis=(-1, -2))
    assert jnp.allclose(metrics["point_prediction_ae"], ref_ae, atol=1e-4, rtol=1e-4)
    assert jnp.allclose(metrics["point_prediction_se"], ref_se, atol=1e-4, rtol=1e-4)
    assert jnp.allclose(metrics["prediction_loss"], jnp.mean(ref_pl), atol=1e-4, rtol=1e-4)

    print("KERNEL_OK")
</pallas_src>

<mosaic_0001>
module attributes {stable_mosaic.version = 11 : i64} {
  func.func @_loss_kernel(%arg0: i32, %arg1: memref<1x1x128xf32, #tpu.memory_space<vmem>>, %arg2: memref<1x1x128xf32, #tpu.memory_space<vmem>>, %arg3: memref<1x1x128xf32, #tpu.memory_space<vmem>>, %arg4: memref<1x1x1xf32, #tpu.memory_space<vmem>>, %arg5: memref<1x1x1xf32, #tpu.memory_space<vmem>>) attributes {dimension_semantics = [#tpu.dimension_semantics<parallel>], iteration_bounds = array<i64: 2>, scalar_prefetch = 0 : i64, scratch_operands = 0 : i64, tpu.core_type = #tpu.core_type<tc>, window_params = [{transform_indices = @transform_0, window_bounds = array<i64: 1, 1, 128>}, {transform_indices = @transform_1, window_bounds = array<i64: 1, 1, 128>}, {transform_indices = @transform_2, window_bounds = array<i64: 1, 1, 128>}, {transform_indices = @transform_3, window_bounds = array<i64: 1, 1, 1>}, {transform_indices = @transform_4, window_bounds = array<i64: 1, 1, 1>}]} {
    %c0 = arith.constant 0 : index
    %c0_0 = arith.constant 0 : index
    %c0_1 = arith.constant 0 : index
    %0 = vector.load %arg1[%c0, %c0_0, %c0_1] : memref<1x1x128xf32, #tpu.memory_space<vmem>>, vector<1x1x128xf32>
    %c0_2 = arith.constant 0 : index
    %c0_3 = arith.constant 0 : index
    %c0_4 = arith.constant 0 : index
    %1 = vector.load %arg2[%c0_2, %c0_3, %c0_4] : memref<1x1x128xf32, #tpu.memory_space<vmem>>, vector<1x1x128xf32>
    %2 = arith.subf %0, %1 : vector<1x1x128xf32>
    %3 = arith.mulf %2, %2 : vector<1x1x128xf32>
    %cst = arith.constant dense<0.000000e+00> : vector<1x1xf32>
    %4 = vector.multi_reduction <add>, %3, %cst [2] : vector<1x1x128xf32> to vector<1x1xf32>
    %5 = vector.shape_cast %4 : vector<1x1xf32> to vector<1x1x1xf32>
    %cst_5 = arith.constant 7.812500e-03 : f32
    %6 = vector.broadcast %cst_5 : f32 to vector<1x1x1xf32>
    %7 = arith.mulf %5, %6 : vector<1x1x1xf32>
    %c0_6 = arith.constant 0 : index
    %c0_7 = arith.constant 0 : index
    %c0_8 = arith.constant 0 : index
    %8 = vector.load %arg5[%c0_6, %c0_7, %c0_8] : memref<1x1x1xf32, #tpu.memory_space<vmem>>, vector<1x1x1xf32>
    tpu.vector_store %arg5[%c0_6, %c0_7, %c0_8], %7 {strides = array<i32>} : memref<1x1x1xf32, #tpu.memory_space<vmem>>, vector<1x1x1xf32>,
    %cst_9 = arith.constant dense<0.000000e+00> : vector<1x128xf32>
    %9 = vector.multi_reduction <add>, %0, %cst_9 [1] : vector<1x1x128xf32> to vector<1x128xf32>
    %10 = vector.shape_cast %9 : vector<1x128xf32> to vector<1x1x128xf32>
    %cst_10 = arith.constant 1.000000e+00 : f32
    %11 = vector.broadcast %cst_10 : f32 to vector<1x1x128xf32>
    %12 = arith.mulf %10, %11 : vector<1x1x128xf32>
    %13 = arith.subf %12, %1 : vector<1x1x128xf32>
    %14 = arith.mulf %13, %13 : vector<1x1x128xf32>
    %cst_11 = arith.constant dense<0.000000e+00> : vector<1x1xf32>
    %15 = vector.multi_reduction <add>, %14, %cst_11 [2] : vector<1x1x128xf32> to vector<1x1xf32>
    %16 = vector.shape_cast %15 : vector<1x1xf32> to vector<1x1x1xf32>
    %cst_12 = arith.constant 7.812500e-03 : f32
    %17 = vector.broadcast %cst_12 : f32 to vector<1x1x1xf32>
    %18 = arith.mulf %16, %17 : vector<1x1x1xf32>
    %c0_13 = arith.constant 0 : index
    %c0_14 = arith.constant 0 : index
    %c0_15 = arith.constant 0 : index
    %19 = vector.load %arg4[%c0_13, %c0_14, %c0_15] : memref<1x1x1xf32, #tpu.memory_space<vmem>>, vector<1x1x1xf32>
    tpu.vector_store %arg4[%c0_13, %c0_14, %c0_15], %18 {strides = array<i32>} : memref<1x1x1xf32, #tpu.memory_space<vmem>>, vector<1x1x1xf32>,
    %20 = arith.subf %0, %1 : vector<1x1x128xf32>
    %21 = math.absf %20 : vector<1x1x128xf32>
    %c0_16 = arith.constant 0 : index
    %c0_17 = arith.constant 0 : index
    %c0_18 = arith.constant 0 : index
    %22 = vector.load %arg3[%c0_16, %c0_17, %c0_18] : memref<1x1x128xf32, #tpu.memory_space<vmem>>, vector<1x1x128xf32>
    tpu.vector_store %arg3[%c0_16, %c0_17, %c0_18], %21 {strides = array<i32>} : memref<1x1x128xf32, #tpu.memory_space<vmem>>, vector<1x1x128xf32>,
    return
  }
  func.func @transform_0(%arg0: i32) -> (i32, i32, i32) {
    %c0_i32 = arith.constant 0 : i32
    %c0_i32_0 = arith.constant 0 : i32
    %c0_i32_1 = arith.constant 0 : i32
    return %arg0, %c0_i32, %c0_i32_0 : i32, i32, i32
  }
  func.func @transform_1(%arg0: i32) -> (i32, i32, i32) {
    %c0_i32 = arith.constant 0 : i32
    %c0_i32_0 = arith.constant 0 : i32
    %c0_i32_1 = arith.constant 0 : i32
    return %arg0, %c0_i32, %c0_i32_0 : i32, i32, i32
  }
  func.func @transform_2(%arg0: i32) -> (i32, i32, i32) {
    %c0_i32 = arith.constant 0 : i32
    %c0_i32_0 = arith.constant 0 : i32
    %c0_i32_1 = arith.constant 0 : i32
    return %arg0, %c0_i32, %c0_i32_0 : i32, i32, i32
  }
  func.func @transform_3(%arg0: i32) -> (i32, i32, i32) {
    %c0_i32 = arith.constant 0 : i32
    %c0_i32_0 = arith.constant 0 : i32
    %c0_i32_1 = arith.constant 0 : i32
    return %arg0, %c0_i32, %c0_i32_0 : i32, i32, i32
  }
  func.func @transform_4(%arg0: i32) -> (i32, i32, i32) {
    %c0_i32 = arith.constant 0 : i32
    %c0_i32_0 = arith.constant 0 : i32
    %c0_i32_1 = arith.constant 0 : i32
    return %arg0, %c0_i32, %c0_i32_0 : i32, i32, i32
  }
}

</mosaic_0001>

<llo_original>
// kernel: tpu_custom_call.1
$region0: #{tpu_custom_call.1}
  #allocation0 [shape = 'u32[]', space=smem, size = 0x4, offset = 0x4, fixed_abs, tag = 'smem constant byte address 0x4 - core index']
  #allocation1 [shape = 'u32[144,128]{1,0:T(1,128)}', space=vmem, size = 0x12000, scoped, tag = 'internal scratch']
  %s0 = inlined_call_operand.hbm [shape: f32[2,1,128], index: 0, kind: input, shape index: {}]
  %s1 = inlined_call_operand.hbm [shape: f32[2,1,128], index: 1, kind: input, shape index: {}]
  %s2 = inlined_call_operand.hbm [shape: f32[2,1,128], index: 2, kind: output, shape index: {0}]
  %s3 = inlined_call_operand.vmem [shape: f32[2,1,1], index: 3, kind: output, shape index: {1}]
  %s4 = inlined_call_operand.vmem [shape: f32[2,1,1], index: 4, kind: output, shape index: {2}]
  %5 = xla_tuple %s2, %s3, %s4
  %s6 = sld [smem:[#allocation0]]
  $region65: #{tpu_custom_call.1} parent=0
    _
  %s8 = ssub.s32 1, %s6
  %s9 = scalar_select 0, %s8, %s6
  $region1: #{tpu_custom_call.1} parent=0
    #allocation2 [shape = 'u8[1024]{0}', space=vmem, size = 0x400, scoped, tag = 'input window, operand 0']
    #allocation3 [shape = 's32[2]{0}', space=sflag, size = 0x8, scoped, tag = 'scoped memory for tpu_custom_call.1']
    #allocation4 [shape = 's32[2]{0}', space=sflag, size = 0x8, scoped, tag = 'scoped memory for tpu_custom_call.1']
    #allocation5 [shape = 'u8[1024]{0}', space=vmem, size = 0x400, scoped, tag = 'input window, operand 1']
    #allocation6 [shape = 's32[2]{0}', space=sflag, size = 0x8, scoped, tag = 'scoped memory for tpu_custom_call.1']
    #allocation7 [shape = 'u8[1024]{0}', space=vmem, size = 0x400, scoped, tag = 'output window, operand 0']
    %10 = vsyncpa [#allocation3], 0
    %s11 = scalar_lea.sflag [#allocation3], 1
    %12 = vsyncpa %s11, 0
    %13 = vsyncpa [#allocation6], 0
    %s14 = scalar_lea.sflag [#allocation6], 1
    %15 = vsyncpa %s14, 0
    %16 = vsyncpa [#allocation4], 0
    %s17 = scalar_lea.sflag [#allocation4], 1
    %18 = vsyncpa %s17, 0
    loop: start=0, step=1, limit=4
    $region2: #{tpu_custom_call.1} parent=1 // loop_pre_header
      _
    $region3: #{tpu_custom_call.1} parent=1 // loop_header
      %s20 = sphi 0, %s24
      %p21 = scmp.ge.s32.totalorder %s20, 4
      %s30 = sphi 0, %s32
      %s33 = sphi 0, %s30
      %s34 = sphi 0, %s33
      %s50 = sphi 0, %s34
      %s56 = sphi 0, %s58
      %s59 = sphi 0, %s56
      %s60 = sphi 0, %s59
      %s76 = sphi 0, %s60
      %s82 = sphi 0, %s84
      %s85 = sphi 0, %s82
      %s86 = sphi 0, %s85
      %s102 = sphi 0, %s86
      %s108 = sphi 0, %s110
      %s111 = sphi 0, %s108
      %s112 = sphi 0, %s111
      %s128 = sphi 0, %s112
      %s134 = sphi 0, %s136
      %s137 = sphi 0, %s134
      %s138 = sphi 0, %s137
      %s154 = sphi 0, %s138
    $region4: #{tpu_custom_call.1} parent=1 // loop_header_branch
      %23 = sbr.rel (%p21) target = $region8
    $region5: #{tpu_custom_call.1} parent=1 // loop_body
      %s25 = ssub.s32 %s20, 1
      %s26 = ssub.s32 %s20, 2
      %s27 = sadd.s32 %s20, 1
      %s28 = ssub.s32 %s20, %s27
      %p29 = scmp.eq.s32.totalorder %s28, 0
      %s31 = sadd.s32 %s30, 1
      %s32 = scalar_select %p29, %s30, %s31
      %p35 = pneg %p29
      %p36 = scmp.eq.s32.totalorder %s20, 1
      %p37 = por %p35, %p36
      %p38 = scmp.ne.s32.totalorder %s30, %s33
      %p39 = scmp.eq.s32.totalorder %s20, 0
      %p40 = por %p38, %p39
      %p41 = scmp.ne.s32.totalorder %s30, %s33
      %p42 = scmp.eq.s32.totalorder %s25, 1
      %p43 = por %p41, %p42
      %p44 = scmp.ne.s32.totalorder %s33, %s34
      %p45 = scmp.eq.s32.totalorder %s25, 0
      %p46 = por %p44, %p45
      %p47 = scmp.ne.s32.totalorder %s33, %s34
      %p48 = scmp.eq.s32.totalorder %s26, 1
      %p49 = por %p47, %p48
      %p51 = scmp.ne.s32.totalorder %s34, %s50
      %p52 = scmp.eq.s32.totalorder %s26, 0
      %p53 = por %p51, %p52
      %s54 = ssub.s32 %s20, %s27
      %p55 = scmp.eq.s32.totalorder %s54, 0
      %s57 = sadd.s32 %s56, 1
      %s58 = scalar_select %p55, %s56, %s57
      %p61 = pneg %p55
      %p62 = scmp.eq.s32.totalorder %s20, 1
      %p63 = por %p61, %p62
      %p64 = scmp.ne.s32.totalorder %s56, %s59
      %p65 = scmp.eq.s32.totalorder %s20, 0
      %p66 = por %p64, %p65
      %p67 = scmp.ne.s32.totalorder %s56, %s59
      %p68 = scmp.eq.s32.totalorder %s25, 1
      %p69 = por %p67, %p68
      %p70 = scmp.ne.s32.totalorder %s59, %s60
      %p71 = scmp.eq.s32.totalorder %s25, 0
      %p72 = por %p70, %p71
      %p73 = scmp.ne.s32.totalorder %s59, %s60
      %p74 = scmp.eq.s32.totalorder %s26, 1
      %p75 = por %p73, %p74
      %p77 = scmp.ne.s32.totalorder %s60, %s76
      %p78 = scmp.eq.s32.totalorder %s26, 0
      %p79 = por %p77, %p78
      %s80 = ssub.s32 %s20, %s27
      %p81 = scmp.eq.s32.totalorder %s80, 0
      %s83 = sadd.s32 %s82, 1
      %s84 = scalar_select %p81, %s82, %s83
      %p87 = pneg %p81
      %p88 = scmp.eq.s32.totalorder %s20, 1
      %p89 = por %p87, %p88
      %p90 = scmp.ne.s32.totalorder %s82, %s85
      %p91 = scmp.eq.s32.totalorder %s20, 0
      %p92 = por %p90, %p91
      %p93 = scmp.ne.s32.totalorder %s82, %s85
      %p94 = scmp.eq.s32.totalorder %s25, 1
      %p95 = por %p93, %p94
      %p96 = scmp.ne.s32.totalorder %s85, %s86
      %p97 = scmp.eq.s32.totalorder %s25, 0
      %p98 = por %p96, %p97
      %p99 = scmp.ne.s32.totalorder %s85, %s86
      %p100 = scmp.eq.s32.totalorder %s26, 1
      %p101 = por %p99, %p100
      %p103 = scmp.ne.s32.totalorder %s86, %s102
      %p104 = scmp.eq.s32.totalorder %s26, 0
      %p105 = por %p103, %p104
      %s106 = ssub.s32 %s20, %s27
      %p107 = scmp.eq.s32.totalorder %s106, 0
      %s109 = sadd.s32 %s108, 1
      %s110 = scalar_select %p107, %s108, %s109
      %p113 = pneg %p107
      %p114 = scmp.eq.s32.totalorder %s20, 1
      %p115 = por %p113, %p114
      %p116 = scmp.ne.s32.totalorder %s108, %s111
      %p117 = scmp.eq.s32.totalorder %s20, 0
      %p118 = por %p116, %p117
      %p119 = scmp.ne.s32.totalorder %s108, %s111
      %p120 = scmp.eq.s32.totalorder %s25, 1
      %p121 = por %p119, %p120
      %p122 = scmp.ne.s32.totalorder %s111, %s112
      %p123 = scmp.eq.s32.totalorder %s25, 0
      %p124 = por %p122, %p123
      %p125 = scmp.ne.s32.totalorder %s111, %s112
      %p126 = scmp.eq.s32.totalorder %s26, 1
      %p127 = por %p125, %p126
      %p129 = scmp.ne.s32.totalorder %s112, %s128
      %p130 = scmp.eq.s32.totalorder %s26, 0
      %p131 = por %p129, %p130
      %s132 = ssub.s32 %s20, %s27
      %p133 = scmp.eq.s32.totalorder %s132, 0
      %s135 = sadd.s32 %s134, 1
      %s136 = scalar_select %p133, %s134, %s135
      %p139 = pneg %p133
      %p140 = scmp.eq.s32.totalorder %s20, 1
      %p141 = por %p139, %p140
      %p142 = scmp.ne.s32.totalorder %s134, %s137
      %p143 = scmp.eq.s32.totalorder %s20, 0
      %p144 = por %p142, %p143
      %p145 = scmp.ne.s32.totalorder %s134, %s137
      %p146 = scmp.eq.s32.totalorder %s25, 1
      %p147 = por %p145, %p146
      %p148 = scmp.ne.s32.totalorder %s137, %s138
      %p149 = scmp.eq.s32.totalorder %s25, 0
      %p150 = por %p148, %p149
      %p151 = scmp.ne.s32.totalorder %s137, %s138
      %p152 = scmp.eq.s32.totalorder %s26, 1
      %p153 = por %p151, %p152
      %p155 = scmp.ne.s32.totalorder %s138, %s154
      %p156 = scmp.eq.s32.totalorder %s26, 0
      %p157 = por %p155, %p156
      %p158 = scmp.le.s32.totalorder 1, %s20
      %p159 = scmp.lt.s32.totalorder %s20, 3
      %p160 = pnand %p158, %p159
      %p161 = pneg %p160
      // Predicated region
      $region9: #{tpu_custom_call.1} parent=5 // pred_check
        _
      $region10: #{tpu_custom_call.1} parent=5 // pred_check_branch
        %163 = sbr.rel (%p160) target = $region12
      $region11: #{tpu_custom_call.1} parent=5 // pred_region
        %s164 = ssub.s32 %s20, 1
      $region12: #{tpu_custom_call.1} parent=5 // pred_fallthru
        _
      %p165 = scmp.lt.s32.totalorder %s20, 2
      // Predicated region
      $region13: #{tpu_custom_call.1} parent=5 // pred_check
        %p166 = pneg %p165
      $region14: #{tpu_custom_call.1} parent=5 // pred_check_branch
        %168 = sbr.rel (%p166) target = $region16
      $region15: #{tpu_custom_call.1} parent=5 // pred_region
        // Predicated region
        $region17: #{tpu_custom_call.1} parent=15 // pred_check
          %p169 = pneg %p40
        $region18: #{tpu_custom_call.1} parent=15 // pred_check_branch
          %171 = sbr.rel (%p169) target = $region20
        $region19: #{tpu_custom_call.1} parent=15 // pred_region
          %s172 = sand.u32 %s30, 1
          %s173 = scalar_lea.sflag [#allocation3], %s172
          %s174 = sand.u32 %s30, 1
          %s175 = scalar_lea.vmem [#allocation2], %s174
          %s177 = ssub.s32 16, 16
          %178 = vsyncadd %s173, %s177
          %s179 = smul.addr %s20, 16
          %s180 = scalar_lea.hbm %s0, %s179
          %s182 = sshll.u32 %s175, 4
          %s183 = int_to_ptr.vmem [resolvable:$true] %s182
          %185 = dma.hbm_to_vmem [thread:$0]  %s180, 16, %s183, %s173
        $region20: #{tpu_custom_call.1} parent=15 // pred_fallthru
          _
        // Predicated region
        $region21: #{tpu_custom_call.1} parent=15 // pred_check
          %p186 = pneg %p66
        $region22: #{tpu_custom_call.1} parent=15 // pred_check_branch
          %188 = sbr.rel (%p186) target = $region24
        $region23: #{tpu_custom_call.1} parent=15 // pred_region
          %s189 = sand.u32 %s56, 1
          %s190 = scalar_lea.sflag [#allocation6], %s189
          %s191 = sand.u32 %s56, 1
          %s192 = scalar_lea.vmem [#allocation5], %s191
          %s194 = ssub.s32 16, 16
          %195 = vsyncadd %s190, %s194
          %s196 = smul.addr %s20, 16
          %s197 = scalar_lea.hbm %s1, %s196
          %s199 = sshll.u32 %s192, 4
          %s200 = int_to_ptr.vmem [resolvable:$true] %s199
          %202 = dma.hbm_to_vmem [thread:$0]  %s197, 16, %s200, %s190
        $region24: #{tpu_custom_call.1} parent=15 // pred_fallthru
          _
      $region16: #{tpu_custom_call.1} parent=5 // pred_fallthru
        _
      %p203 = scmp.le.s32.totalorder 1, %s20
      %p204 = scmp.lt.s32.totalorder %s20, 3
      %p205 = pnand %p203, %p204
      %p206 = pneg %p205
      // Predicated region
      $region25: #{tpu_custom_call.1} parent=5 // pred_check
        _
      $region26: #{tpu_custom_call.1} parent=5 // pred_check_branch
        %208 = sbr.rel (%p205) target = $region28
      $region27: #{tpu_custom_call.1} parent=5 // pred_region
        %s209 = ssub.s32 %s20, 1
        %s210 = sand.u32 %s33, 1
        %s211 = scalar_lea.sflag [#allocation3], %s210
        %s212 = sand.u32 %s33, 1
        %s213 = scalar_lea.vmem [#allocation2], %s212
        // Predicated region
        $region29: #{tpu_custom_call.1} parent=27 // pred_check
          %p214 = pneg %p46
        $region30: #{tpu_custom_call.1} parent=27 // pred_check_branch
          %216 = sbr.rel (%p214) target = $region32
        $region31: #{tpu_custom_call.1} parent=27 // pred_region
          %217 = dma.done %s211, 16
        $region32: #{tpu_custom_call.1} parent=27 // pred_fallthru
          _
        %s218 = sand.u32 %s59, 1
        %s219 = scalar_lea.sflag [#allocation6], %s218
        %s220 = sand.u32 %s59, 1
        %s221 = scalar_lea.vmem [#allocation5], %s220
        // Predicated region
        $region33: #{tpu_custom_call.1} parent=27 // pred_check
          %p222 = pneg %p72
        $region34: #{tpu_custom_call.1} parent=27 // pred_check_branch
          %224 = sbr.rel (%p222) target = $region36
        $region35: #{tpu_custom_call.1} parent=27 // pred_region
          %225 = dma.done %s219, 16
        $region36: #{tpu_custom_call.1} parent=27 // pred_fallthru
          _
        %s226 = sand.u32 %s33, 1
        %s227 = scalar_lea.sflag [#allocation3], %s226
        %s228 = sand.u32 %s33, 1
        %s229 = scalar_lea.vmem [#allocation2], %s228
        %p230 = pneg %p46
        %p231 = pneg %p43
        %s232 = sand.u32 %s59, 1
        %s233 = scalar_lea.sflag [#allocation6], %s232
        %s234 = sand.u32 %s59, 1
        %s235 = scalar_lea.vmem [#allocation5], %s234
        %p236 = pneg %p72
        %p237 = pneg %p69
        %p238 = pneg %p98
        %p239 = pneg %p95
        %s240 = sand.u32 %s85, 1
        %s241 = scalar_lea.sflag [#allocation4], %s240
        %s242 = sand.u32 %s85, 1
        %s243 = scalar_lea.vmem [#allocation7], %s242
        %p244 = pneg %p124
        %p245 = pneg %p121
        %p246 = scmp.lt.s32.totalorder %s25, 1
        %s247 = scalar_select %p246, %s25, 1
        %s248 = scalar_lea.vmem %s3, %s247
        %p249 = pneg %p150
        %p250 = pneg %p147
        %p251 = scmp.lt.s32.totalorder %s25, 1
        %s252 = scalar_select %p251, %s25, 1
        %s253 = scalar_lea.vmem %s4, %s252
        %p254 = scmp.lt.s32.totalorder %s25, 1
        %s255 = scalar_select %p254, %s25, 1
        %s256 = scalar_lea.vmem %s3, %s255
        %p257 = scmp.lt.s32.totalorder %s25, 1
        %s258 = scalar_select %p257, %s25, 1
        %s259 = scalar_lea.vmem %s4, %s258
        %v260 = vld [vmem:[%s213] sm:$0x1]
        %v261 = vld [vmem:[%s221] sm:$0x1]
        %v262 = vsub.f32 %v260, %v261
        %v263 = vmul.f32 %v262, %v262
        %vm264 = vcmask 1040384
        %v265 = vsel %vm264, %v263, 0.0
        %266 = vadd.xlane.f32.xlu0 %v265
        %v267 = vpop.xlane.xlu0 %266
        %v268 = vmul.f32 %v267, 0.0078125
        %vm269 = vcmask 0
        %270 = vst.msk [vmem:[%s259] sm:$0x1] %vm269, %v268
        %v271 = vadd.f32 %v260, 0.0
        %v272 = vsub.f32 %v271, %v261
        %v273 = vmul.f32 %v272, %v272
        %v274 = vsel %vm264, %v273, 0.0
        %275 = vadd.xlane.f32.xlu0 %v274
        %v276 = vpop.xlane.xlu0 %275
        %v277 = vmul.f32 %v276, 0.0078125
        %278 = vst.msk [vmem:[%s256] sm:$0x1] %vm269, %v277
        %v279 = vand.u32 2147483647, %v262
        %280 = vst [vmem:[%s243] sm:$0x1] %v279
        %s281 = sand.u32 %s85, 1
        %s282 = scalar_lea.sflag [#allocation4], %s281
        %s283 = sand.u32 %s85, 1
        %s284 = scalar_lea.vmem [#allocation7], %s283
        %p285 = scmp.lt.s32.totalorder %s25, 1
        %s286 = scalar_select %p285, %s25, 1
        %s287 = scalar_lea.vmem %s3, %s286
        %p288 = scmp.lt.s32.totalorder %s25, 1
        %s289 = scalar_select %p288, %s25, 1
        %s290 = scalar_lea.vmem %s4, %s289
        // Predicated region
        $region37: #{tpu_custom_call.1} parent=27 // pred_check
          %p291 = pneg %p95
        $region38: #{tpu_custom_call.1} parent=27 // pred_check_branch
          %293 = sbr.rel (%p291) target = $region40
        $region39: #{tpu_custom_call.1} parent=27 // pred_region
          %s295 = ssub.s32 16, 16
          %296 = vsyncadd %s282, %s295
          %s297 = smul.addr %s25, 16
          %s298 = scalar_lea.hbm %s2, %s297
          %s300 = sshll.u32 %s284, 4
          %s301 = int_to_ptr.vmem [resolvable:$true] %s300
          %303 = dma.vmem_to_hbm [thread:$0]  %s301, 16, %s298, %s282
        $region40: #{tpu_custom_call.1} parent=27 // pred_fallthru
          _
        // Predicated region
        $region41: #{tpu_custom_call.1} parent=27 // pred_check
          %p304 = pneg %p121
        $region42: #{tpu_custom_call.1} parent=27 // pred_check_branch
          %306 = sbr.rel (%p304) target = $region44
        $region43: #{tpu_custom_call.1} parent=27 // pred_region
          _
        $region44: #{tpu_custom_call.1} parent=27 // pred_fallthru
          _
        // Predicated region
        $region45: #{tpu_custom_call.1} parent=27 // pred_check
          %p307 = pneg %p147
        $region46: #{tpu_custom_call.1} parent=27 // pred_check_branch
          %309 = sbr.rel (%p307) target = $region48
        $region47: #{tpu_custom_call.1} parent=27 // pred_region
          _
        $region48: #{tpu_custom_call.1} parent=27 // pred_fallthru
          _
      $region28: #{tpu_custom_call.1} parent=5 // pred_fallthru
        _
      %p310 = scmp.le.s32.totalorder 2, %s20
      // Predicated region
      $region49: #{tpu_custom_call.1} parent=5 // pred_check
        %p311 = pneg %p310
      $region50: #{tpu_custom_call.1} parent=5 // pred_check_branch
        %313 = sbr.rel (%p311) target = $region52
      $region51: #{tpu_custom_call.1} parent=5 // pred_region
        %s314 = ssub.s32 %s20, 2
        // Predicated region
        $region53: #{tpu_custom_call.1} parent=51 // pred_check
          %p315 = pneg %p101
        $region54: #{tpu_custom_call.1} parent=51 // pred_check_branch
          %317 = sbr.rel (%p315) target = $region56
        $region55: #{tpu_custom_call.1} parent=51 // pred_region
          %s318 = sand.u32 %s86, 1
          %s319 = scalar_lea.sflag [#allocation4], %s318
          %s320 = sand.u32 %s86, 1
          %s321 = scalar_lea.vmem [#allocation7], %s320
          %322 = dma.done %s319, 16
        $region56: #{tpu_custom_call.1} parent=51 // pred_fallthru
          _
        // Predicated region
        $region57: #{tpu_custom_call.1} parent=51 // pred_check
          %p323 = pneg %p127
        $region58: #{tpu_custom_call.1} parent=51 // pred_check_branch
          %325 = sbr.rel (%p323) target = $region60
        $region59: #{tpu_custom_call.1} parent=51 // pred_region
          %p326 = scmp.lt.s32.totalorder %s26, 1
          %s327 = scalar_select %p326, %s26, 1
          %s328 = scalar_lea.vmem %s3, %s327
        $region60: #{tpu_custom_call.1} parent=51 // pred_fallthru
          _
        // Predicated region
        $region61: #{tpu_custom_call.1} parent=51 // pred_check
          %p329 = pneg %p153
        $region62: #{tpu_custom_call.1} parent=51 // pred_check_branch
          %331 = sbr.rel (%p329) target = $region64
        $region63: #{tpu_custom_call.1} parent=51 // pred_region
          %p332 = scmp.lt.s32.totalorder %s26, 1
          %s333 = scalar_select %p332, %s26, 1
          %s334 = scalar_lea.vmem %s4, %s333
        $region64: #{tpu_custom_call.1} parent=51 // pred_fallthru
          _
      $region52: #{tpu_custom_call.1} parent=5 // pred_fallthru
        _
    $region6: #{tpu_custom_call.1} parent=1 // loop_footer
      %s24 = sadd.s32 1, %s20
    $region7: #{tpu_custom_call.1} parent=1 // loop_footer_branch
      %19 = sbr.rel target = $region3
    $region8: #{tpu_custom_call.1} parent=1 // loop_exit
      _
    %335 = vsyncpa [#allocation3], 1
    %s336 = scalar_lea.sflag [#allocation3], 1
    %337 = vsyncpa %s336, 1
    %338 = vsyncpa [#allocation6], 1
    %s339 = scalar_lea.sflag [#allocation6], 1
    %340 = vsyncpa %s339, 1
    %341 = vsyncpa [#allocation4], 1
    %s342 = scalar_lea.sflag [#allocation4], 1
    %343 = vsyncpa %s342, 1

</llo_original>
